<compile_context>
chip_gen: v6e
topology: v6e:2x2x1
jax: 0.10.0
libtpu: 0.0.40
codegen_flags: <defaults>
</compile_context>

<pallas_src>
import jax
import jax.numpy as jnp
from jax.experimental import pallas as pl
from jax.experimental.pallas import tpu as pltpu

LANE = 128
DEFAULT_BLOCK_BYTES = 8 << 20          # 8 MiB per operand block
SMALL_RAGGED_LIMIT_BYTES = 4 << 20     # ragged arrays up to this run as one block


def _square_kernel(x_ref, o_ref):
    v = x_ref[...]
    o_ref[...] = v * v  # reference forward is x ** 2 (no ReLU)


def _vmem_limit_bytes(block_bytes: int) -> int:
    """Explicit scoped-VMEM budget: in+out double-buffered + headroom, capped
    at 3/4 of physical VMEM (generation-aware; v7x only has 64 MiB)."""
    want = max(32 << 20, 4 * block_bytes + (8 << 20))
    try:
        cap = pltpu.get_tpu_info().vmem_capacity_bytes
        want = min(want, (cap * 3) // 4)
    except Exception:
        # Conservative cap that is legal on every generation (v7x: 64 MiB phys).
        want = min(want, 48 << 20)
    return int(want)


def relu_square(x: jax.Array, *, donate_input: bool = False,
                block_bytes: int | None = None) -> jax.Array:
    """Elementwise x ** 2 (any shape / dtype), computed in a Pallas TPU kernel."""
    orig_shape = x.shape
    dtype = x.dtype
    n = x.size
    if n == 0:
        return x

    itemsize = jnp.dtype(dtype).itemsize
    # sublane packing factor: f32 -> 1, bf16 -> 2, int8/fp8 -> 4
    packing = max(1, 4 // itemsize)
    row_mult = 8 * packing  # legal row-tile granularity for packed dtypes

    x_flat = jnp.ravel(x)
    io_alias = {0: 0} if donate_input else {}

    if n % LANE != 0:
        if n * itemsize <= SMALL_RAGGED_LIMIT_BYTES:
            # Small lane-ragged input: single full-extent block (exempt from the
            # (8,128) divisibility rule).  No jnp.pad / output slice copies.
            x2d = x_flat.reshape(1, n)
            out = pl.pallas_call(
                _square_kernel,
                out_shape=jax.ShapeDtypeStruct((1, n), dtype),
                cost_estimate=pl.CostEstimate(
                    flops=n, transcendentals=0, bytes_accessed=2 * n * itemsize),
                input_output_aliases=io_alias,
            )(x2d)
            return out.reshape(orig_shape)
        # Large & lane-ragged (rare): fall back to padding to lane width.
        n_pad = pl.cdiv(n, LANE) * LANE
        x_flat = jnp.pad(x_flat, (0, n_pad - n))
        padded = True
        io_alias = {}  # shapes differ after padding; cannot alias
    else:
        n_pad = n
        padded = False

    rows = n_pad // LANE
    x2d = x_flat.reshape(rows, LANE)

    # Block sizing: target 8 MiB per operand (legal under the explicit VMEM
    # budget on every generation), rounded to the dtype's packed row multiple.
    tgt_bytes = DEFAULT_BLOCK_BYTES if block_bytes is None else block_bytes
    tile_rows = max(row_mult, tgt_bytes // (LANE * itemsize))
    tile_rows = (tile_rows // row_mult) * row_mult
    if rows <= tile_rows:
        # Single block covering the whole array (full-extent block is always legal).
        tile_rows = rows

    grid = (pl.cdiv(rows, tile_rows),)
    actual_block_bytes = tile_rows * LANE * itemsize

    cost = pl.CostEstimate(
        flops=n_pad,
        transcendentals=0,
        bytes_accessed=2 * n_pad * itemsize,
    )

    out2d = pl.pallas_call(
        _square_kernel,
        out_shape=jax.ShapeDtypeStruct((rows, LANE), dtype),
        grid_spec=pltpu.PrefetchScalarGridSpec(
            num_scalar_prefetch=0,
            grid=grid,
            in_specs=[pl.BlockSpec((tile_rows, LANE), lambda i: (i, 0))],
            out_specs=pl.BlockSpec((tile_rows, LANE), lambda i: (i, 0)),
        ),
        compiler_params=pltpu.CompilerParams(
            dimension_semantics=("parallel",),
            vmem_limit_bytes=_vmem_limit_bytes(actual_block_bytes),
        ),
        cost_estimate=cost,
        input_output_aliases=io_alias,
    )(x2d)

    if padded:
        return out2d.reshape(-1)[:n].reshape(orig_shape)
    return out2d.reshape(orig_shape)


if __name__ == "__main__":
    key = jax.random.PRNGKey(0)

    # Module-consistent small input: batch=2, channels=4, spatial=16x16.
    x = jax.random.normal(key, (2, 4, 16, 16), dtype=jnp.float32)
    y = jax.block_until_ready(relu_square(x))
    ref = x ** 2
    assert y.shape == x.shape and y.dtype == x.dtype
    assert jnp.allclose(y, ref, atol=1e-6, rtol=1e-6)

    # Lane-ragged shape (single full-extent block path, no pad/slice copies).
    x2 = jax.random.normal(jax.random.PRNGKey(1), (3, 5, 7), dtype=jnp.float32)
    y2 = jax.block_until_ready(relu_square(x2))
    assert jnp.allclose(y2, x2 ** 2, atol=1e-6, rtol=1e-6)

    # bf16 input (packed sublane layout, lane-aligned, single block).
    x3 = jax.random.normal(jax.random.PRNGKey(2), (4, 256), dtype=jnp.bfloat16)
    y3 = jax.block_until_ready(relu_square(x3))
    assert jnp.allclose(y3.astype(jnp.float32), (x3.astype(jnp.float32)) ** 2,
                        atol=1e-2, rtol=1e-2)

    # Explicitly exercise a multi-step grid with a ragged FINAL block
    # (rows % tile_rows != 0) by forcing a small block size.
    x4 = jax.random.normal(jax.random.PRNGKey(3), (138, 256), dtype=jnp.float32)
    y4 = jax.block_until_ready(relu_square(x4, block_bytes=8 * 1024))
    assert jnp.allclose(y4, x4 ** 2, atol=1e-6, rtol=1e-6)

    print("KERNEL_OK")
</pallas_src>

<mosaic_0001>
module attributes {stable_mosaic.version = 11 : i64} {
  func.func @_square_kernel(%arg0: i32, %arg1: memref<16x128xf32, #tpu.memory_space<vmem>>, %arg2: memref<16x128xf32, #tpu.memory_space<vmem>>) attributes {dimension_semantics = [#tpu.dimension_semantics<parallel>], iteration_bounds = array<i64: 1>, scalar_prefetch = 0 : i64, scratch_operands = 0 : i64, tpu.core_type = #tpu.core_type<tc>, window_params = [{transform_indices = @transform_0, window_bounds = array<i64: 16, 128>}, {transform_indices = @transform_1, window_bounds = array<i64: 16, 128>}]} {
    %c0 = arith.constant 0 : index
    %c0_0 = arith.constant 0 : index
    %0 = vector.load %arg1[%c0, %c0_0] : memref<16x128xf32, #tpu.memory_space<vmem>>, vector<16x128xf32>
    %1 = arith.mulf %0, %0 : vector<16x128xf32>
    %c0_1 = arith.constant 0 : index
    %c0_2 = arith.constant 0 : index
    %2 = vector.load %arg2[%c0_1, %c0_2] : memref<16x128xf32, #tpu.memory_space<vmem>>, vector<16x128xf32>
    tpu.vector_store %arg2[%c0_1, %c0_2], %1 {strides = array<i32>} : memref<16x128xf32, #tpu.memory_space<vmem>>, vector<16x128xf32>,
    return
  }
  func.func @transform_0(%arg0: i32) -> (i32, i32) {
    %c0_i32 = arith.constant 0 : i32
    %c0_i32_0 = arith.constant 0 : i32
    return %arg0, %c0_i32 : i32, i32
  }
  func.func @transform_1(%arg0: i32) -> (i32, i32) {
    %c0_i32 = arith.constant 0 : i32
    %c0_i32_0 = arith.constant 0 : i32
    return %arg0, %c0_i32 : i32, i32
  }
}

</mosaic_0001>

<llo_original>
// kernel: tpu_custom_call.1
$region0: #{tpu_custom_call.1}
  #allocation0 [shape = 'u32[]', space=smem, size = 0x4, offset = 0x4, fixed_abs, tag = 'smem constant byte address 0x4 - core index']
  #allocation1 [shape = 'u32[144,128]{1,0:T(1,128)}', space=vmem, size = 0x12000, scoped, tag = 'internal scratch']
  %s0 = inlined_call_operand.hbm [shape: f32[16,128], index: 0, kind: input, shape index: {}]
  %s1 = inlined_call_operand.hbm [shape: f32[16,128], index: 1, kind: output, shape index: {}]
  %s2 = sld [smem:[#allocation0]]
  $region18: #{tpu_custom_call.1} parent=0
    _
  %s4 = ssub.s32 1, %s2
  %s5 = scalar_select 0, %s4, %s2
  $region1: #{tpu_custom_call.1} parent=0
    #allocation2 [shape = 'u8[8192]{0}', space=vmem, size = 0x2000, scoped, tag = 'input window, operand 0, single buffered']
    #allocation3 [shape = 's32[1]{0}', space=sflag, size = 0x4, scoped, tag = 'scoped memory for tpu_custom_call.1']
    #allocation4 [shape = 's32[1]{0}', space=sflag, size = 0x4, scoped, tag = 'scoped memory for tpu_custom_call.1']
    #allocation5 [shape = 'u8[8192]{0}', space=vmem, size = 0x2000, scoped, tag = 'output window, operand 0, single buffered']
    %6 = vsyncpa [#allocation3], 0
    %7 = vsyncpa [#allocation4], 0
    // Predicated region
    $region2: #{tpu_custom_call.1} parent=1 // pred_check
      _
    $region3: #{tpu_custom_call.1} parent=1 // pred_check_branch
      %9 = sbr.rel (0) target = $region5
    $region4: #{tpu_custom_call.1} parent=1 // pred_region
      %s11 = ssub.s32 256, 256
      %12 = vsyncadd [#allocation3], %s11
      %s13 = sshll.u32 [#allocation2], 4
      %s14 = int_to_ptr.vmem [resolvable:$true] %s13
      %19 = dma.hbm_to_vmem [thread:$0]  %s0, 256, %s14, [#allocation3], 128, 128, 8
    $region5: #{tpu_custom_call.1} parent=1 // pred_fallthru
      _
    // Predicated region
    $region6: #{tpu_custom_call.1} parent=1 // pred_check
      _
    $region7: #{tpu_custom_call.1} parent=1 // pred_check_branch
      %21 = sbr.rel (0) target = $region9
    $region8: #{tpu_custom_call.1} parent=1 // pred_region
      %22 = dma.done [#allocation3], 256
    $region9: #{tpu_custom_call.1} parent=1 // pred_fallthru
      _
    %v23 = vld [vmem:[#allocation2] sm:$0xff]
    %v24 = vld [vmem:[#allocation2 + $0x8] sm:$0xff]
    %v25 = vmul.f32 %v23, %v23
    %v26 = vmul.f32 %v24, %v24
    %27 = vst [vmem:[#allocation5] sm:$0xff] %v25
    %28 = vst [vmem:[#allocation5 + $0x8] sm:$0xff] %v26
    // Predicated region
    $region10: #{tpu_custom_call.1} parent=1 // pred_check
      _
    $region11: #{tpu_custom_call.1} parent=1 // pred_check_branch
      %30 = sbr.rel (0) target = $region13
    $region12: #{tpu_custom_call.1} parent=1 // pred_region
      %s32 = ssub.s32 256, 256
      %33 = vsyncadd [#allocation4], %s32
      %s34 = sshll.u32 [#allocation5], 4
      %s35 = int_to_ptr.vmem [resolvable:$true] %s34
      %40 = dma.vmem_to_hbm [thread:$0]  %s35, 256, %s1, [#allocation4], 128, 128, 8
    $region13: #{tpu_custom_call.1} parent=1 // pred_fallthru
      _
    // Predicated region
    $region14: #{tpu_custom_call.1} parent=1 // pred_check
      _
    $region15: #{tpu_custom_call.1} parent=1 // pred_check_branch
      %42 = sbr.rel (0) target = $region17
    $region16: #{tpu_custom_call.1} parent=1 // pred_region
      %43 = dma.done [#allocation4], 256
    $region17: #{tpu_custom_call.1} parent=1 // pred_fallthru
      _
    %44 = vsyncpa [#allocation3], 1
    %45 = vsyncpa [#allocation4], 1

</llo_original>
